<compile_context>
chip_gen: v7x
topology: tpu7x:2x2x1
jax: 0.10.0
libtpu: 0.0.40
codegen_flags: <defaults>
</compile_context>

<pallas_src>
import jax
import jax.numpy as jnp
from jax.experimental import pallas as pl
from jax.experimental.pallas import tpu as pltpu


def reward_net_kernel(x_ref,
                      w1_ref, b1_ref,
                      w2_ref, b2_ref,
                      w3_ref, b3_ref,
                      w4_ref, b4_ref,
                      o_ref):
    # x_ref: (D, tile_b) bf16, batch on lanes.
    x = x_ref[...]

    # fc1 + relu
    h1 = jnp.dot(w1_ref[...], x, preferred_element_type=jnp.float32) + b1_ref[...]
    h1 = jnp.maximum(h1, 0.0).astype(jnp.bfloat16)            # (64, tile_b)

    # fc2 + leaky_relu (slope 0.01) as a single VPU max
    h2 = jnp.dot(w2_ref[...], h1, preferred_element_type=jnp.float32) + b2_ref[...]
    h2 = jnp.maximum(h2, 0.01 * h2).astype(jnp.bfloat16)      # (128, tile_b)

    # fc3 + relu
    h3 = jnp.dot(w3_ref[...], h2, preferred_element_type=jnp.float32) + b3_ref[...]
    h3 = jnp.maximum(h3, 0.0).astype(jnp.bfloat16)            # (64, tile_b)

    # fc4 (linear) -> (1, tile_b): lane-dense output row, batch on lanes
    q = jnp.dot(w4_ref[...], h3, preferred_element_type=jnp.float32) + b4_ref[...]
    o_ref[...] = q.astype(o_ref.dtype)                        # block is (1, tile_b)


def _choose_tile_b(B):
    # Prefer a lane-aligned tile that divides B and leaves >= 2 grid steps
    # (keeps both v7x TensorCores busy and enables double-buffered pipelining);
    # otherwise fall back to the full (small) batch in a single grid step.
    for cand in (1024, 512, 256, 128):
        if B % cand == 0 and B // cand >= 2:
            return cand
    return B


def reward_network_forward(x, params, *, tile_b=None):
    """x: (B, D) float32.

    params: PyTorch-layout weights wN of shape (out, in) and biases bN of shape
    (out, 1), all float32 (cast to bf16 / f32 as needed here).
    """
    B, D = x.shape
    if tile_b is None:
        tile_b = _choose_tile_b(B)
    assert B % tile_b == 0, "tile_b must divide the batch size"
    assert tile_b == B or tile_b % 128 == 0, (
        "tile_b is the lane dim of the activation tiles: it must be a "
        "multiple of 128, or equal to the full batch")
    num_tiles = B // tile_b

    # Wrapper-side layout plumbing: batch on lanes + bf16 matmul operands.
    x_t = x.astype(jnp.bfloat16).T                                    # (D, B)
    w = [params[f"w{i}"].astype(jnp.bfloat16) for i in (1, 2, 3, 4)]  # (out, in)
    b = [params[f"b{i}"].astype(jnp.float32) for i in (1, 2, 3, 4)]   # (out, 1)

    def full(arr):
        return pl.BlockSpec(arr.shape, lambda i: (0, 0))

    flops = 2 * B * (D * 64 + 64 * 128 + 128 * 64 + 64 * 1)
    bytes_accessed = (B * D * 2 + B * 4
                      + sum(int(a.size) * a.dtype.itemsize for a in w + b))

    out = pl.pallas_call(
        reward_net_kernel,
        out_shape=jax.ShapeDtypeStruct((1, B), jnp.float32),
        grid_spec=pltpu.PrefetchScalarGridSpec(
            num_scalar_prefetch=0,
            grid=(num_tiles,),
            in_specs=[
                pl.BlockSpec((D, tile_b), lambda i: (0, i)),   # x tile (batch on lanes)
                full(w[0]), full(b[0]),
                full(w[1]), full(b[1]),
                full(w[2]), full(b[2]),
                full(w[3]), full(b[3]),
            ],
            out_specs=pl.BlockSpec((1, tile_b), lambda i: (0, i)),
        ),
        compiler_params=pltpu.CompilerParams(
            dimension_semantics=("parallel",)),
        cost_estimate=pl.CostEstimate(
            flops=flops, transcendentals=0, bytes_accessed=bytes_accessed),
    )(x_t,
      w[0], b[0], w[1], b[1], w[2], b[2], w[3], b[3])

    # (1, B) lane-dense row -> (B, 1) column, preserving batch order.
    return out.reshape(B, 1)


def init_params(key, input_shape):
    """Deterministic init mirroring nn.Linear (PyTorch layout: W (out, in), b (out, 1))."""
    sizes = [(input_shape, 64), (64, 128), (128, 64), (64, 1)]
    params = {}
    for idx, (fan_in, fan_out) in enumerate(sizes, start=1):
        key, kw, kb = jax.random.split(key, 3)
        bound = 1.0 / (fan_in ** 0.5)
        params[f"w{idx}"] = jax.random.uniform(
            kw, (fan_out, fan_in), jnp.float32, -bound, bound)
        params[f"b{idx}"] = jax.random.uniform(
            kb, (fan_out, 1), jnp.float32, -bound, bound)
    return params


def reference_forward_bf16(x, params):
    """Mirrors the kernel math exactly (bf16 operands, f32 accumulation)."""
    xt = x.astype(jnp.bfloat16).T
    w = [params[f"w{i}"].astype(jnp.bfloat16) for i in (1, 2, 3, 4)]
    b = [params[f"b{i}"] for i in (1, 2, 3, 4)]
    h1 = jnp.maximum(
        jnp.dot(w[0], xt, preferred_element_type=jnp.float32) + b[0], 0.0
    ).astype(jnp.bfloat16)
    y = jnp.dot(w[1], h1, preferred_element_type=jnp.float32) + b[1]
    h2 = jnp.maximum(y, 0.01 * y).astype(jnp.bfloat16)
    h3 = jnp.maximum(
        jnp.dot(w[2], h2, preferred_element_type=jnp.float32) + b[2], 0.0
    ).astype(jnp.bfloat16)
    q = jnp.dot(w[3], h3, preferred_element_type=jnp.float32) + b[3]
    return q.T  # (B, 1)


def reference_forward_f32(x, params):
    """Pure f32 PyTorch-equivalent forward (semantic reference)."""
    h1 = jnp.maximum(x @ params["w1"].T + params["b1"].T, 0.0)
    y = h1 @ params["w2"].T + params["b2"].T
    h2 = jnp.maximum(y, 0.01 * y)
    h3 = jnp.maximum(h2 @ params["w3"].T + params["b3"].T, 0.0)
    return h3 @ params["w4"].T + params["b4"].T


if __name__ == "__main__":
    key = jax.random.PRNGKey(0)
    k_in, k_par = jax.random.split(key)

    B, D = 16, 32          # small batch of flattened reward-net inputs
    x = jax.random.normal(k_in, (B, D), jnp.float32)
    params = init_params(k_par, D)

    q = reward_network_forward(x, params)
    jax.block_until_ready(q)
    assert q.shape == (B, 1)

    # Tight check against a reference that mirrors the kernel's bf16/f32 math.
    q_bf16 = reference_forward_bf16(x, params)
    assert jnp.allclose(q, q_bf16, atol=2e-3, rtol=2e-3), \
        f"max abs diff vs matched-precision ref: {float(jnp.max(jnp.abs(q - q_bf16)))}"

    # Loose sanity check against the full-f32 PyTorch-equivalent forward
    # (bf16 matmul operands introduce small drift).
    q_f32 = reference_forward_f32(x, params)
    assert jnp.allclose(q, q_f32, atol=1e-1, rtol=1e-1), \
        f"max abs diff vs f32 ref: {float(jnp.max(jnp.abs(q - q_f32)))}"

    print("KERNEL_OK")
</pallas_src>

<mosaic_0001>
module attributes {stable_mosaic.version = 11 : i64} {
  func.func @reward_net_kernel(%arg0: i32, %arg1: memref<32x16xbf16, #tpu.memory_space<vmem>>, %arg2: memref<64x32xbf16, #tpu.memory_space<vmem>>, %arg3: memref<64x1xf32, #tpu.memory_space<vmem>>, %arg4: memref<128x64xbf16, #tpu.memory_space<vmem>>, %arg5: memref<128x1xf32, #tpu.memory_space<vmem>>, %arg6: memref<64x128xbf16, #tpu.memory_space<vmem>>, %arg7: memref<64x1xf32, #tpu.memory_space<vmem>>, %arg8: memref<1x64xbf16, #tpu.memory_space<vmem>>, %arg9: memref<1x1xf32, #tpu.memory_space<vmem>>, %arg10: memref<1x16xf32, #tpu.memory_space<vmem>>) attributes {dimension_semantics = [#tpu.dimension_semantics<parallel>], iteration_bounds = array<i64: 1>, scalar_prefetch = 0 : i64, scratch_operands = 0 : i64, tpu.core_type = #tpu.core_type<tc>, window_params = [{transform_indices = @transform_0, window_bounds = array<i64: 32, 16>}, {pipeline_mode = #tpu.pipeline_mode<synchronous>, transform_indices = @transform_1, window_bounds = array<i64: 64, 32>}, {pipeline_mode = #tpu.pipeline_mode<synchronous>, transform_indices = @transform_2, window_bounds = array<i64: 64, 1>}, {pipeline_mode = #tpu.pipeline_mode<synchronous>, transform_indices = @transform_3, window_bounds = array<i64: 128, 64>}, {pipeline_mode = #tpu.pipeline_mode<synchronous>, transform_indices = @transform_4, window_bounds = array<i64: 128, 1>}, {pipeline_mode = #tpu.pipeline_mode<synchronous>, transform_indices = @transform_5, window_bounds = array<i64: 64, 128>}, {pipeline_mode = #tpu.pipeline_mode<synchronous>, transform_indices = @transform_6, window_bounds = array<i64: 64, 1>}, {pipeline_mode = #tpu.pipeline_mode<synchronous>, transform_indices = @transform_7, window_bounds = array<i64: 1, 64>}, {pipeline_mode = #tpu.pipeline_mode<synchronous>, transform_indices = @transform_8, window_bounds = array<i64: 1, 1>}, {transform_indices = @transform_9, window_bounds = array<i64: 1, 16>}]} {
    %c0 = arith.constant 0 : index
    %c0_0 = arith.constant 0 : index
    %0 = vector.load %arg1[%c0, %c0_0] : memref<32x16xbf16, #tpu.memory_space<vmem>>, vector<32x16xbf16>
    %c0_1 = arith.constant 0 : index
    %c0_2 = arith.constant 0 : index
    %1 = vector.load %arg2[%c0_1, %c0_2] : memref<64x32xbf16, #tpu.memory_space<vmem>>, vector<64x32xbf16>
    %cst = arith.constant dense<0.000000e+00> : vector<64x16xf32>
    %2 = tpu.matmul %1, %0, %cst {dimension_numbers = #tpu.dot_dimension_numbers<[1], [0], [0], [1], [0, 0, 1, 1], [], []>} : vector<64x32xbf16>, vector<32x16xbf16>, vector<64x16xf32> -> vector<64x16xf32>
    %c0_3 = arith.constant 0 : index
    %c0_4 = arith.constant 0 : index
    %3 = vector.load %arg3[%c0_3, %c0_4] : memref<64x1xf32, #tpu.memory_space<vmem>>, vector<64x1xf32>
    %4 = vector.broadcast %3 : vector<64x1xf32> to vector<64x16xf32>
    %5 = arith.addf %2, %4 : vector<64x16xf32>
    %cst_5 = arith.constant 0.000000e+00 : f32
    %6 = vector.broadcast %cst_5 : f32 to vector<64x16xf32>
    %7 = arith.maximumf %5, %6 : vector<64x16xf32>
    %8 = arith.truncf %7 : vector<64x16xf32> to vector<64x16xbf16>
    %c0_6 = arith.constant 0 : index
    %c0_7 = arith.constant 0 : index
    %9 = vector.load %arg4[%c0_6, %c0_7] : memref<128x64xbf16, #tpu.memory_space<vmem>>, vector<128x64xbf16>
    %cst_8 = arith.constant dense<0.000000e+00> : vector<128x16xf32>
    %10 = tpu.matmul %9, %8, %cst_8 {dimension_numbers = #tpu.dot_dimension_numbers<[1], [0], [0], [1], [0, 0, 1, 1], [], []>} : vector<128x64xbf16>, vector<64x16xbf16>, vector<128x16xf32> -> vector<128x16xf32>
    %c0_9 = arith.constant 0 : index
    %c0_10 = arith.constant 0 : index
    %11 = vector.load %arg5[%c0_9, %c0_10] : memref<128x1xf32, #tpu.memory_space<vmem>>, vector<128x1xf32>
    %12 = vector.broadcast %11 : vector<128x1xf32> to vector<128x16xf32>
    %13 = arith.addf %10, %12 : vector<128x16xf32>
    %cst_11 = arith.constant 0.00999999977 : f32
    %14 = vector.broadcast %cst_11 : f32 to vector<128x16xf32>
    %15 = arith.mulf %14, %13 : vector<128x16xf32>
    %16 = arith.maximumf %13, %15 : vector<128x16xf32>
    %17 = arith.truncf %16 : vector<128x16xf32> to vector<128x16xbf16>
    %c0_12 = arith.constant 0 : index
    %c0_13 = arith.constant 0 : index
    %18 = vector.load %arg6[%c0_12, %c0_13] : memref<64x128xbf16, #tpu.memory_space<vmem>>, vector<64x128xbf16>
    %cst_14 = arith.constant dense<0.000000e+00> : vector<64x16xf32>
    %19 = tpu.matmul %18, %17, %cst_14 {dimension_numbers = #tpu.dot_dimension_numbers<[1], [0], [0], [1], [0, 0, 1, 1], [], []>} : vector<64x128xbf16>, vector<128x16xbf16>, vector<64x16xf32> -> vector<64x16xf32>
    %c0_15 = arith.constant 0 : index
    %c0_16 = arith.constant 0 : index
    %20 = vector.load %arg7[%c0_15, %c0_16] : memref<64x1xf32, #tpu.memory_space<vmem>>, vector<64x1xf32>
    %21 = vector.broadcast %20 : vector<64x1xf32> to vector<64x16xf32>
    %22 = arith.addf %19, %21 : vector<64x16xf32>
    %cst_17 = arith.constant 0.000000e+00 : f32
    %23 = vector.broadcast %cst_17 : f32 to vector<64x16xf32>
    %24 = arith.maximumf %22, %23 : vector<64x16xf32>
    %25 = arith.truncf %24 : vector<64x16xf32> to vector<64x16xbf16>
    %c0_18 = arith.constant 0 : index
    %c0_19 = arith.constant 0 : index
    %26 = vector.load %arg8[%c0_18, %c0_19] : memref<1x64xbf16, #tpu.memory_space<vmem>>, vector<1x64xbf16>
    %cst_20 = arith.constant dense<0.000000e+00> : vector<1x16xf32>
    %27 = tpu.matmul %26, %25, %cst_20 {dimension_numbers = #tpu.dot_dimension_numbers<[1], [0], [0], [1], [0, 0, 1, 1], [], []>} : vector<1x64xbf16>, vector<64x16xbf16>, vector<1x16xf32> -> vector<1x16xf32>
    %c0_21 = arith.constant 0 : index
    %c0_22 = arith.constant 0 : index
    %28 = vector.load %arg9[%c0_21, %c0_22] : memref<1x1xf32, #tpu.memory_space<vmem>>, vector<1x1xf32>
    %29 = vector.broadcast %28 : vector<1x1xf32> to vector<1x16xf32>
    %30 = arith.addf %27, %29 : vector<1x16xf32>
    %c0_23 = arith.constant 0 : index
    %c0_24 = arith.constant 0 : index
    %31 = vector.load %arg10[%c0_23, %c0_24] : memref<1x16xf32, #tpu.memory_space<vmem>>, vector<1x16xf32>
    tpu.vector_store %arg10[%c0_23, %c0_24], %30 {strides = array<i32>} : memref<1x16xf32, #tpu.memory_space<vmem>>, vector<1x16xf32>,
    return
  }
  func.func @transform_0(%arg0: i32) -> (i32, i32) {
    %c0_i32 = arith.constant 0 : i32
    %c0_i32_0 = arith.constant 0 : i32
    return %c0_i32, %arg0 : i32, i32
  }
  func.func @transform_1(%arg0: i32) -> (i32, i32) {
    %c0_i32 = arith.constant 0 : i32
    %c0_i32_0 = arith.constant 0 : i32
    %c0_i32_1 = arith.constant 0 : i32
    return %c0_i32, %c0_i32_0 : i32, i32
  }
  func.func @transform_2(%arg0: i32) -> (i32, i32) {
    %c0_i32 = arith.constant 0 : i32
    %c0_i32_0 = arith.constant 0 : i32
    %c0_i32_1 = arith.constant 0 : i32
    return %c0_i32, %c0_i32_0 : i32, i32
  }
  func.func @transform_3(%arg0: i32) -> (i32, i32) {
    %c0_i32 = arith.constant 0 : i32
    %c0_i32_0 = arith.constant 0 : i32
    %c0_i32_1 = arith.constant 0 : i32
    return %c0_i32, %c0_i32_0 : i32, i32
  }
  func.func @transform_4(%arg0: i32) -> (i32, i32) {
    %c0_i32 = arith.constant 0 : i32
    %c0_i32_0 = arith.constant 0 : i32
    %c0_i32_1 = arith.constant 0 : i32
    return %c0_i32, %c0_i32_0 : i32, i32
  }
  func.func @transform_5(%arg0: i32) -> (i32, i32) {
    %c0_i32 = arith.constant 0 : i32
    %c0_i32_0 = arith.constant 0 : i32
    %c0_i32_1 = arith.constant 0 : i32
    return %c0_i32, %c0_i32_0 : i32, i32
  }
  func.func @transform_6(%arg0: i32) -> (i32, i32) {
    %c0_i32 = arith.constant 0 : i32
    %c0_i32_0 = arith.constant 0 : i32
    %c0_i32_1 = arith.constant 0 : i32
    return %c0_i32, %c0_i32_0 : i32, i32
  }
  func.func @transform_7(%arg0: i32) -> (i32, i32) {
    %c0_i32 = arith.constant 0 : i32
    %c0_i32_0 = arith.constant 0 : i32
    %c0_i32_1 = arith.constant 0 : i32
    return %c0_i32, %c0_i32_0 : i32, i32
  }
  func.func @transform_8(%arg0: i32) -> (i32, i32) {
    %c0_i32 = arith.constant 0 : i32
    %c0_i32_0 = arith.constant 0 : i32
    %c0_i32_1 = arith.constant 0 : i32
    return %c0_i32, %c0_i32_0 : i32, i32
  }
  func.func @transform_9(%arg0: i32) -> (i32, i32) {
    %c0_i32 = arith.constant 0 : i32
    %c0_i32_0 = arith.constant 0 : i32
    return %c0_i32, %arg0 : i32, i32
  }
}

</mosaic_0001>

<llo_original>
// kernel: tpu_custom_call.1
$region0: #{tpu_custom_call.1}
  #allocation0 [shape = 'u32[]', space=smem, size = 0x4, offset = 0x4, fixed_abs, tag = 'smem constant byte address 0x4 - core index']
  #allocation1 [shape = 'u32[144,128]{1,0:T(1,128)}', space=vmem, size = 0x12000, scoped, tag = 'internal scratch']
  #allocation2 [shape = 'f32[1,1]{1,0:T(1,128)S(1)}', space=vmem, size = 0x200, scoped, tag = 'scoped memory for tpu_custom_call.1']
  %s0 = inlined_call_operand.vmem [shape: bf16[32,16], index: 0, kind: input, shape index: {}]
  %s1 = inlined_call_operand.vmem [shape: bf16[64,32], index: 1, kind: input, shape index: {}]
  %s2 = inlined_call_operand.vmem [shape: f32[64,1], index: 2, kind: input, shape index: {}]
  %s3 = inlined_call_operand.vmem [shape: bf16[128,64], index: 3, kind: input, shape index: {}]
  %s4 = inlined_call_operand.vmem [shape: f32[128,1], index: 4, kind: input, shape index: {}]
  %s5 = inlined_call_operand.vmem [shape: bf16[64,128], index: 5, kind: input, shape index: {}]
  %s6 = inlined_call_operand.vmem [shape: f32[64,1], index: 6, kind: input, shape index: {}]
  %s7 = inlined_call_operand.vmem [shape: bf16[1,64], index: 7, kind: input, shape index: {}]
  %s8 = inlined_call_operand.<no memory space> [shape: f32[1,1], index: 8, kind: input, shape index: {}]
  %s9 = inlined_call_operand.hbm [shape: f32[1,16], index: 9, kind: output, shape index: {}]
  %s10 = sld [smem:[#allocation0]]
  $region46: #{tpu_custom_call.1} parent=0
    _
  %s12 = ssub.s32 1, %s10
  %s13 = scalar_select 0, %s12, %s10
  %v14 = vstv %s8
  %15 = vst [vmem:[#allocation2] sm:$0x1] %v14
  $region1: #{tpu_custom_call.1} parent=0
    #allocation3 [shape = 'u8[512]{0}', space=vmem, size = 0x400, scoped, tag = 'output window, operand 0, single buffered']
    #allocation4 [shape = 's32[1]{0}', space=sflag, size = 0x4, scoped, tag = 'scoped memory for tpu_custom_call.1']
    %16 = vsyncpa [#allocation4], 0
    // Predicated region
    $region2: #{tpu_custom_call.1} parent=1 // pred_check
      _
    $region3: #{tpu_custom_call.1} parent=1 // pred_check_branch
      %18 = sbr.rel (0) target = $region5
    $region4: #{tpu_custom_call.1} parent=1 // pred_region
      _
    $region5: #{tpu_custom_call.1} parent=1 // pred_fallthru
      _
    // Predicated region
    $region6: #{tpu_custom_call.1} parent=1 // pred_check
      _
    $region7: #{tpu_custom_call.1} parent=1 // pred_check_branch
      %20 = sbr.rel (0) target = $region9
    $region8: #{tpu_custom_call.1} parent=1 // pred_region
      _
    $region9: #{tpu_custom_call.1} parent=1 // pred_fallthru
      _
    // Predicated region
    $region10: #{tpu_custom_call.1} parent=1 // pred_check
      _
    $region11: #{tpu_custom_call.1} parent=1 // pred_check_branch
      %22 = sbr.rel (0) target = $region13
    $region12: #{tpu_custom_call.1} parent=1 // pred_region
      _
    $region13: #{tpu_custom_call.1} parent=1 // pred_fallthru
      _
    // Predicated region
    $region14: #{tpu_custom_call.1} parent=1 // pred_check
      _
    $region15: #{tpu_custom_call.1} parent=1 // pred_check_branch
      %24 = sbr.rel (0) target = $region17
    $region16: #{tpu_custom_call.1} parent=1 // pred_region
      _
    $region17: #{tpu_custom_call.1} parent=1 // pred_fallthru
      _
    // Predicated region
    $region18: #{tpu_custom_call.1} parent=1 // pred_check
      _
    $region19: #{tpu_custom_call.1} parent=1 // pred_check_branch
      %26 = sbr.rel (0) target = $region21
    $region20: #{tpu_custom_call.1} parent=1 // pred_region
      _
    $region21: #{tpu_custom_call.1} parent=1 // pred_fallthru
      _
    // Predicated region
    $region22: #{tpu_custom_call.1} parent=1 // pred_check
      _
    $region23: #{tpu_custom_call.1} parent=1 // pred_check_branch
      %28 = sbr.rel (0) target = $region25
    $region24: #{tpu_custom_call.1} parent=1 // pred_region
      _
    $region25: #{tpu_custom_call.1} parent=1 // pred_fallthru
      _
    // Predicated region
    $region26: #{tpu_custom_call.1} parent=1 // pred_check
      _
    $region27: #{tpu_custom_call.1} parent=1 // pred_check_branch
      %30 = sbr.rel (0) target = $region29
    $region28: #{tpu_custom_call.1} parent=1 // pred_region
      _
    $region29: #{tpu_custom_call.1} parent=1 // pred_fallthru
      _
    // Predicated region
    $region30: #{tpu_custom_call.1} parent=1 // pred_check
      _
    $region31: #{tpu_custom_call.1} parent=1 // pred_check_branch
      %32 = sbr.rel (0) target = $region33
    $region32: #{tpu_custom_call.1} parent=1 // pred_region
      _
    $region33: #{tpu_custom_call.1} parent=1 // pred_fallthru
      _
    // Predicated region
    $region34: #{tpu_custom_call.1} parent=1 // pred_check
      _
    $region35: #{tpu_custom_call.1} parent=1 // pred_check_branch
      %34 = sbr.rel (0) target = $region37
    $region36: #{tpu_custom_call.1} parent=1 // pred_region
      _
    $region37: #{tpu_custom_call.1} parent=1 // pred_fallthru
      _
    %v36 = vld [vmem:[%s0] sm:$0xf]
    %v37 = vld [vmem:[%s0 + $0x4] sm:$0xf]
    %v38 = vld [vmem:[%s0 + $0x8] sm:$0xf]
    %v39 = vld [vmem:[%s0 + $0xc] sm:$0xf]
    %v40 = vld [vmem:[%s1] sm:$0xf]
    %v41 = vld [vmem:[%s1 + $0x4] sm:$0xf]
    %v42 = vld [vmem:[%s1 + $0x8] sm:$0xf]
    %v43 = vld [vmem:[%s1 + $0xc] sm:$0xf]
    %v44 = vld [vmem:[%s1 + $0x10] sm:$0xf]
    %v45 = vld [vmem:[%s1 + $0x14] sm:$0xf]
    %v46 = vld [vmem:[%s1 + $0x18] sm:$0xf]
    %v47 = vld [vmem:[%s1 + $0x1c] sm:$0xf]
    %v48 = vld [vmem:[%s2] sm:$0xff]
    %v49 = vld [vmem:[%s2 + $0x8] sm:$0xff]
    %v50 = vld [vmem:[%s2 + $0x10] sm:$0xff]
    %v51 = vld [vmem:[%s2 + $0x18] sm:$0xff]
    %v52 = vld [vmem:[%s2 + $0x20] sm:$0xff]
    %v53 = vld [vmem:[%s2 + $0x28] sm:$0xff]
    %v54 = vld [vmem:[%s2 + $0x30] sm:$0xff]
    %v55 = vld [vmem:[%s2 + $0x38] sm:$0xff]
    %57 = vset.pattern.permute.xlu0 0
    %58 = vperm.xlu0 %57, %v48
    %v59 = vpop.permute.xlu0 %58
    %62 = vset.pattern.permute.xlu0 0
    %63 = vperm.xlu0 %62, %v49
    %v64 = vpop.permute.xlu0 %63
    %67 = vset.pattern.permute.xlu0 0
    %68 = vperm.xlu0 %67, %v50
    %v69 = vpop.permute.xlu0 %68
    %72 = vset.pattern.permute.xlu0 0
    %73 = vperm.xlu0 %72, %v51
    %v74 = vpop.permute.xlu0 %73
    %77 = vset.pattern.permute.xlu0 0
    %78 = vperm.xlu0 %77, %v52
    %v79 = vpop.permute.xlu0 %78
    %82 = vset.pattern.permute.xlu0 0
    %83 = vperm.xlu0 %82, %v53
    %v84 = vpop.permute.xlu0 %83
    %87 = vset.pattern.permute.xlu0 0
    %88 = vperm.xlu0 %87, %v54
    %v89 = vpop.permute.xlu0 %88
    %92 = vset.pattern.permute.xlu0 0
    %93 = vperm.xlu0 %92, %v55
    %v94 = vpop.permute.xlu0 %93
    %v104 = vunpack.c.l.b16 %v40
    %v105 = vunpack.c.l.b16 %v41
    %v106 = vunpack.c.l.b16 %v42
    %v107 = vunpack.c.l.b16 %v43
    %v108 = vunpack.c.l.b16 %v44
    %v109 = vunpack.c.l.b16 %v45
    %v110 = vunpack.c.l.b16 %v46
    %v111 = vunpack.c.l.b16 %v47
    %v112 = vpack.c.b16 %v105, %v104
    %v113 = vpack.c.b16 %v107, %v106
    %v114 = vpack.c.b16 %v109, %v108
    %v115 = vpack.c.b16 %v111, %v110
    %v120 = vunpack.c.l.b16 %v36
    %v121 = vunpack.c.l.b16 %v37
    %v122 = vunpack.c.l.b16 %v38
    %v123 = vunpack.c.l.b16 %v39
    %v124 = vpack.c.b16 %v121, %v120
    %v125 = vpack.c.b16 %v123, %v122
    %vm128 = vcmask 261120
    %v130 = vsel %vm128, %v112, 0
    %v133 = vsel %vm128, %v113, 0
    %v136 = vsel %vm128, %v114, 0
    %v139 = vsel %vm128, %v115, 0
    %141 = vmatprep.subr.bf16.mxu0 0
    %142 = vmatpush1.bf16.msra.mxu0 %v124
    %143 = vmatprep.subr.bf16.mxu0 0
    %144 = vmatpush1.bf16.msra.mxu0 %v125
    %145 = vmatprep.subr.bf16.mxu0 0
    %146 = vmatpush1.bf16.msra.mxu0 0
    %147 = vmatprep.subr.bf16.mxu0 0
    %148 = vmatpush1.bf16.msra.mxu0 0
    %149 = vmatprep.subr.bf16.mxu0 0
    %150 = vmatpush1.bf16.msra.mxu0 0
    %151 = vmatprep.subr.bf16.mxu0 0
    %152 = vmatpush1.bf16.msra.mxu0 0
    %153 = vmatprep.subr.bf16.mxu0 0
    %154 = vmatpush1.bf16.msra.mxu0 0
    %155 = vmatprep.subr.bf16.mxu0 0
    %156 = vmatpush1.bf16.msra.mxu0 0
    %157 = vmatprep.subr.bf16.mxu0 0
    %158 = vmatpush1.bf16.msra.mxu0 0
    %159 = vmatprep.subr.bf16.mxu0 0
    %160 = vmatpush1.bf16.msra.mxu0 0
    %161 = vmatprep.subr.bf16.mxu0 0
    %162 = vmatpush1.bf16.msra.mxu0 0
    %163 = vmatprep.subr.bf16.mxu0 0
    %164 = vmatpush1.bf16.msra.mxu0 0
    %165 = vmatprep.subr.bf16.mxu0 0
    %166 = vmatpush1.bf16.msra.mxu0 0
    %167 = vmatprep.subr.bf16.mxu0 0
    %168 = vmatpush1.bf16.msra.mxu0 0
    %169 = vmatprep.subr.bf16.mxu0 0
    %170 = vmatpush1.bf16.msra.mxu0 0
    %171 = vmatprep.subr.bf16.mxu0 0
    %172 = vmatpush1.bf16.msra.mxu0 0
    %173 = vmatprep.mubr.bf16.mxu0 0
    %174 = vmatmul.mubr.bf16.gmra.mrb[0].mxu0 %v130
    %v175 = vpop.f32.mrb[0].mxu0
    %v176 = vadd.f32 %v59, %v175
    %v177 = vpop.f32.mrb[0].mxu0
    %v178 = vpop.f32.mrb[0].mxu0
    %v179 = vadd.f32 %v64, %v178
    %v180 = vpop.f32.mrb[0].mxu0
    %181 = vmatprep.mubr.bf16.mxu0 0
    %182 = vmatmul.mubr.bf16.gmra.mrb[0].mxu0 %v133
    %v183 = vpop.f32.mrb[0].mxu0
    %v184 = vadd.f32 %v69, %v183
    %v185 = vpop.f32.mrb[0].mxu0
    %v186 = vpop.f32.mrb[0].mxu0
    %v187 = vadd.f32 %v74, %v186
    %v188 = vpop.f32.mrb[0].mxu0
    %189 = vmatprep.mubr.bf16.mxu0 0
    %190 = vmatmul.mubr.bf16.gmra.mrb[0].mxu0 %v136
    %v191 = vpop.f32.mrb[0].mxu0
    %v192 = vadd.f32 %v79, %v191
    %v193 = vpop.f32.mrb[0].mxu0
    %v194 = vpop.f32.mrb[0].mxu0
    %v195 = vadd.f32 %v84, %v194
    %v196 = vpop.f32.mrb[0].mxu0
    %197 = vmatprep.mubr.bf16.mxu0 0
    %198 = vmatmul.mubr.bf16.gmra.mrb[0].mxu0 %v139
    %v199 = vpop.f32.mrb[0].mxu0
    %v200 = vadd.f32 %v89, %v199
    %v201 = vpop.f32.mrb[0].mxu0
    %v202 = vpop.f32.mrb[0].mxu0
    %v203 = vadd.f32 %v94, %v202
    %v204 = vpop.f32.mrb[0].mxu0
    %205 = vdwg.mxu0
    %v206 = vmax.f32 %v176, 0.0
    %v207 = vmax.f32 %v179, 0.0
    %v208 = vmax.f32 %v184, 0.0
    %v209 = vmax.f32 %v187, 0.0
    %v210 = vmax.f32 %v192, 0.0
    %v211 = vmax.f32 %v195, 0.0
    %v212 = vmax.f32 %v200, 0.0
    %v213 = vmax.f32 %v203, 0.0
    %v214 = vpack.c.bf16 %v207, %v206
    %v215 = vpack.c.bf16 %v209, %v208
    %v216 = vpack.c.bf16 %v211, %v210
    %v217 = vpack.c.bf16 %v213, %v212
    %v218 = vld [vmem:[%s3] sm:$0xf]
    %v219 = vld [vmem:[%s3 + $0x4] sm:$0xf]
    %v220 = vld [vmem:[%s3 + $0x8] sm:$0xf]
    %v221 = vld [vmem:[%s3 + $0xc] sm:$0xf]
    %v222 = vld [vmem:[%s3 + $0x10] sm:$0xf]
    %v223 = vld [vmem:[%s3 + $0x14] sm:$0xf]
    %v224 = vld [vmem:[%s3 + $0x18] sm:$0xf]
    %v225 = vld [vmem:[%s3 + $0x1c] sm:$0xf]
    %v226 = vld [vmem:[%s3 + $0x20] sm:$0xf]
    %v227 = vld [vmem:[%s3 + $0x24] sm:$0xf]
    %v228 = vld [vmem:[%s3 + $0x28] sm:$0xf]
    %v229 = vld [vmem:[%s3 + $0x2c] sm:$0xf]
    %v230 = vld [vmem:[%s3 + $0x30] sm:$0xf]
    %v231 = vld [vmem:[%s3 + $0x34] sm:$0xf]
    %v232 = vld [vmem:[%s3 + $0x38] sm:$0xf]
    %v233 = vld [vmem:[%s3 + $0x3c] sm:$0xf]
    %v234 = vld [vmem:[%s4] sm:$0xff]
    %v235 = vld [vmem:[%s4 + $0x8] sm:$0xff]
    %v236 = vld [vmem:[%s4 + $0x10] sm:$0xff]
    %v237 = vld [vmem:[%s4 + $0x18] sm:$0xff]
    %v238 = vld [vmem:[%s4 + $0x20] sm:$0xff]
    %v239 = vld [vmem:[%s4 + $0x28] sm:$0xff]
    %v240 = vld [vmem:[%s4 + $0x30] sm:$0xff]
    %v241 = vld [vmem:[%s4 + $0x38] sm:$0xff]
    %v242 = vld [vmem:[%s4 + $0x40] sm:$0xff]
    %v243 = vld [vmem:[%s4 + $0x48] sm:$0xff]
    %v244 = vld [vmem:[%s4 + $0x50] sm:$0xff]
    %v245 = vld [vmem:[%s4 + $0x58] sm:$0xff]
    %v246 = vld [vmem:[%s4 + $0x60] sm:$0xff]
    %v247 = vld [vmem:[%s4 + $0x68] sm:$0xff]
    %v248 = vld [vmem:[%s4 + $0x70] sm:$0xff]
    %v249 = vld [vmem:[%s4 + $0x78] sm:$0xff]
    %251 = vset.pattern.permute.xlu0 0
    %252 = vperm.xlu0 %251, %v234
    %v253 = vpop.permute.xlu0 %252
    %256 = vset.pattern.permute.xlu0 0
    %257 = vperm.xlu0 %256, %v235
    %v258 = vpop.permute.xlu0 %257
    %261 = vset.pattern.permute.xlu0 0
    %262 = vperm.xlu0 %261, %v236
    %v263 = vpop.permute.xlu0 %262
    %266 = vset.pattern.permute.xlu0 0
    %267 = vperm.xlu0 %266, %v237
    %v268 = vpop.permute.xlu0 %267
    %271 = vset.pattern.permute.xlu0 0
    %272 = vperm.xlu0 %271, %v238
    %v273 = vpop.permute.xlu0 %272
    %276 = vset.pattern.permute.xlu0 0
    %277 = vperm.xlu0 %276, %v239
    %v278 = vpop.permute.xlu0 %277
    %281 = vset.pattern.permute.xlu0 0
    %282 = vperm.xlu0 %281, %v240
    %v283 = vpop.permute.xlu0 %282
    %286 = vset.pattern.permute.xlu0 0
    %287 = vperm.xlu0 %286, %v241
    %v288 = vpop.permute.xlu0 %287
    %291 = vset.pattern.permute.xlu0 0
    %292 = vperm.xlu0 %291, %v242
    %v293 = vpop.permute.xlu0 %292
    %296 = vset.pattern.permute.xlu0 0
    %297 = vperm.xlu0 %296, %v243
    %v298 = vpop.permute.xlu0 %297
    %301 = vset.pattern.permute.xlu0 0
    %302 = vperm.xlu0 %301, %v244
    %v303 = vpop.permute.xlu0 %302
    %306 = vset.pattern.permute.xlu0 0
    %307 = vperm.xlu0 %306, %v245
    %v308 = vpop.permute.xlu0 %307
    %311 = vset.pattern.permute.xlu0 0
    %312 = vperm.xlu0 %311, %v246
    %v313 = vpop.permute.xlu0 %312
    %316 = vset.pattern.permute.xlu0 0
    %317 = vperm.xlu0 %316, %v247
    %v318 = vpop.permute.xlu0 %317
    %321 = vset.pattern.permute.xlu0 0
    %322 = vperm.xlu0 %321, %v248
    %v323 = vpop.permute.xlu0 %322
    %326 = vset.pattern.permute.xlu0 0
    %327 = vperm.xlu0 %326, %v249
    %v328 = vpop.permute.xlu0 %327
    %v346 = vunpack.c.l.b16 %v218
    %v347 = vunpack.c.l.b16 %v219
    %v348 = vunpack.c.l.b16 %v220
    %v349 = vunpack.c.l.b16 %v221
    %v350 = vunpack.c.l.b16 %v222
    %v351 = vunpack.c.l.b16 %v223
    %v352 = vunpack.c.l.b16 %v224
    %v353 = vunpack.c.l.b16 %v225
    %v354 = vunpack.c.l.b16 %v226
    %v355 = vunpack.c.l.b16 %v227
    %v356 = vunpack.c.l.b16 %v228
    %v357 = vunpack.c.l.b16 %v229
    %v358 = vunpack.c.l.b16 %v230
    %v359 = vunpack.c.l.b16 %v231
    %v360 = vunpack.c.l.b16 %v232
    %v361 = vunpack.c.l.b16 %v233
    %v362 = vpack.c.b16 %v347, %v346
    %v363 = vpack.c.b16 %v349, %v348
    %v364 = vpack.c.b16 %v351, %v350
    %v365 = vpack.c.b16 %v353, %v352
    %v366 = vpack.c.b16 %v355, %v354
    %v367 = vpack.c.b16 %v357, %v356
    %v368 = vpack.c.b16 %v359, %v358
    %v369 = vpack.c.b16 %v361, %v360
    %vm370 = vcmask 523264
    %v372 = vsel %vm370, %v362, 0
    %v375 = vsel %vm370, %v363, 0
    %v378 = vsel %vm370, %v364, 0
    %v381 = vsel %vm370, %v365, 0
    %v384 = vsel %vm370, %v366, 0
    %v387 = vsel %vm370, %v367, 0
    %v390 = vsel %vm370, %v368, 0
    %v393 = vsel %vm370, %v369, 0
    %395 = vmatprep.subr.bf16.mxu0 0
    %396 = vmatpush1.bf16.msra.mxu0 %v214
    %397 = vmatprep.subr.bf16.mxu0 0
    %398 = vmatpush1.bf16.msra.mxu0 %v215
    %399 = vmatprep.subr.bf16.mxu0 0
    %400 = vmatpush1.bf16.msra.mxu0 %v216
    %401 = vmatprep.subr.bf16.mxu0 0
    %402 = vmatpush1.bf16.msra.mxu0 %v217
    %403 = vmatprep.subr.bf16.mxu0 0
    %404 = vmatpush1.bf16.msra.mxu0 0
    %405 = vmatprep.subr.bf16.mxu0 0
    %406 = vmatpush1.bf16.msra.mxu0 0
    %407 = vmatprep.subr.bf16.mxu0 0
    %408 = vmatpush1.bf16.msra.mxu0 0
    %409 = vmatprep.subr.bf16.mxu0 0
    %410 = vmatpush1.bf16.msra.mxu0 0
    %411 = vmatprep.subr.bf16.mxu0 0
    %412 = vmatpush1.bf16.msra.mxu0 0
    %413 = vmatprep.subr.bf16.mxu0 0
    %414 = vmatpush1.bf16.msra.mxu0 0
    %415 = vmatprep.subr.bf16.mxu0 0
    %416 = vmatpush1.bf16.msra.mxu0 0
    %417 = vmatprep.subr.bf16.mxu0 0
    %418 = vmatpush1.bf16.msra.mxu0 0
    %419 = vmatprep.subr.bf16.mxu0 0
    %420 = vmatpush1.bf16.msra.mxu0 0
    %421 = vmatprep.subr.bf16.mxu0 0
    %422 = vmatpush1.bf16.msra.mxu0 0
    %423 = vmatprep.subr.bf16.mxu0 0
    %424 = vmatpush1.bf16.msra.mxu0 0
    %425 = vmatprep.subr.bf16.mxu0 0
    %426 = vmatpush1.bf16.msra.mxu0 0
    %427 = vmatprep.mubr.bf16.mxu0 0
    %428 = vmatmul.mubr.bf16.gmra.mrb[0].mxu0 %v372
    %v429 = vpop.f32.mrb[0].mxu0
    %v430 = vadd.f32 %v253, %v429
    %v431 = vpop.f32.mrb[0].mxu0
    %v432 = vpop.f32.mrb[0].mxu0
    %v433 = vadd.f32 %v258, %v432
    %v434 = vpop.f32.mrb[0].mxu0
    %435 = vmatprep.mubr.bf16.mxu0 0
    %436 = vmatmul.mubr.bf16.gmra.mrb[0].mxu0 %v375
    %v437 = vpop.f32.mrb[0].mxu0
    %v438 = vadd.f32 %v263, %v437
    %v439 = vpop.f32.mrb[0].mxu0
    %v440 = vpop.f32.mrb[0].mxu0
    %v441 = vadd.f32 %v268, %v440
    %v442 = vpop.f32.mrb[0].mxu0
    %443 = vmatprep.mubr.bf16.mxu0 0
    %444 = vmatmul.mubr.bf16.gmra.mrb[0].mxu0 %v378
    %v445 = vpop.f32.mrb[0].mxu0
    %v446 = vadd.f32 %v273, %v445
    %v447 = vpop.f32.mrb[0].mxu0
    %v448 = vpop.f32.mrb[0].mxu0
    %v449 = vadd.f32 %v278, %v448
    %v450 = vpop.f32.mrb[0].mxu0
    %451 = vmatprep.mubr.bf16.mxu0 0
    %452 = vmatmul.mubr.bf16.gmra.mrb[0].mxu0 %v381
    %v453 = vpop.f32.mrb[0].mxu0
    %v454 = vadd.f32 %v283, %v453
    %v455 = vpop.f32.mrb[0].mxu0
    %v456 = vpop.f32.mrb[0].mxu0
    %v457 = vadd.f32 %v288, %v456
    %v458 = vpop.f32.mrb[0].mxu0
    %459 = vmatprep.mubr.bf16.mxu0 0
    %460 = vmatmul.mubr.bf16.gmra.mrb[0].mxu0 %v384
    %v461 = vpop.f32.mrb[0].mxu0
    %v462 = vadd.f32 %v293, %v461
    %v463 = vpop.f32.mrb[0].mxu0
    %v464 = vpop.f32.mrb[0].mxu0
    %v465 = vadd.f32 %v298, %v464
    %v466 = vpop.f32.mrb[0].mxu0
    %467 = vmatprep.mubr.bf16.mxu0 0
    %468 = vmatmul.mubr.bf16.gmra.mrb[0].mxu0 %v387
    %v469 = vpop.f32.mrb[0].mxu0
    %v470 = vadd.f32 %v303, %v469
    %v471 = vpop.f32.mrb[0].mxu0
    %v472 = vpop.f32.mrb[0].mxu0
    %v473 = vadd.f32 %v308, %v472
    %v474 = vpop.f32.mrb[0].mxu0
    %475 = vmatprep.mubr.bf16.mxu0 0
    %476 = vmatmul.mubr.bf16.gmra.mrb[0].mxu0 %v390
    %v477 = vpop.f32.mrb[0].mxu0
    %v478 = vadd.f32 %v313, %v477
    %v479 = vpop.f32.mrb[0].mxu0
    %v480 = vpop.f32.mrb[0].mxu0
    %v481 = vadd.f32 %v318, %v480
    %v482 = vpop.f32.mrb[0].mxu0
    %483 = vmatprep.mubr.bf16.mxu0 0
    %484 = vmatmul.mubr.bf16.gmra.mrb[0].mxu0 %v393
    %v485 = vpop.f32.mrb[0].mxu0
    %v486 = vadd.f32 %v323, %v485
    %v487 = vpop.f32.mrb[0].mxu0
    %v488 = vpop.f32.mrb[0].mxu0
    %v489 = vadd.f32 %v328, %v488
    %v490 = vpop.f32.mrb[0].mxu0
    %491 = vdwg.mxu0
    %v492 = vmul.f32 %v430, 0.01
    %v493 = vmul.f32 %v433, 0.01
    %v494 = vmul.f32 %v438, 0.01
    %v495 = vmul.f32 %v441, 0.01
    %v496 = vmul.f32 %v446, 0.01
    %v497 = vmul.f32 %v449, 0.01
    %v498 = vmul.f32 %v454, 0.01
    %v499 = vmul.f32 %v457, 0.01
    %v500 = vmul.f32 %v462, 0.01
    %v501 = vmul.f32 %v465, 0.01
    %v502 = vmul.f32 %v470, 0.01
    %v503 = vmul.f32 %v473, 0.01
    %v504 = vmul.f32 %v478, 0.01
    %v505 = vmul.f32 %v481, 0.01
    %v506 = vmul.f32 %v486, 0.01
    %v507 = vmul.f32 %v489, 0.01
    %v508 = vmax.f32 %v430, %v492
    %v509 = vmax.f32 %v433, %v493
    %v510 = vmax.f32 %v438, %v494
    %v511 = vmax.f32 %v441, %v495
    %v512 = vmax.f32 %v446, %v496
    %v513 = vmax.f32 %v449, %v497
    %v514 = vmax.f32 %v454, %v498
    %v515 = vmax.f32 %v457, %v499
    %v516 = vmax.f32 %v462, %v500
    %v517 = vmax.f32 %v465, %v501
    %v518 = vmax.f32 %v470, %v502
    %v519 = vmax.f32 %v473, %v503
    %v520 = vmax.f32 %v478, %v504
    %v521 = vmax.f32 %v481, %v505
    %v522 = vmax.f32 %v486, %v506
    %v523 = vmax.f32 %v489, %v507
    %v524 = vpack.c.bf16 %v509, %v508
    %v525 = vpack.c.bf16 %v511, %v510
    %v526 = vpack.c.bf16 %v513, %v512
    %v527 = vpack.c.bf16 %v515, %v514
    %v528 = vpack.c.bf16 %v517, %v516
    %v529 = vpack.c.bf16 %v519, %v518
    %v530 = vpack.c.bf16 %v521, %v520
    %v531 = vpack.c.bf16 %v523, %v522
    %v532 = vld [vmem:[%s5] sm:$0xf]
    %v533 = vld [vmem:[%s5 + $0x4] sm:$0xf]
    %v534 = vld [vmem:[%s5 + $0x8] sm:$0xf]
    %v535 = vld [vmem:[%s5 + $0xc] sm:$0xf]
    %v536 = vld [vmem:[%s5 + $0x10] sm:$0xf]
    %v537 = vld [vmem:[%s5 + $0x14] sm:$0xf]
    %v538 = vld [vmem:[%s5 + $0x18] sm:$0xf]
    %v539 = vld [vmem:[%s5 + $0x1c] sm:$0xf]
    %v540 = vld [vmem:[%s6] sm:$0xff]
    %v541 = vld [vmem:[%s6 + $0x8] sm:$0xff]
    %v542 = vld [vmem:[%s6 + $0x10] sm:$0xff]
    %v543 = vld [vmem:[%s6 + $0x18] sm:$0xff]
    %v544 = vld [vmem:[%s6 + $0x20] sm:$0xff]
    %v545 = vld [vmem:[%s6 + $0x28] sm:$0xff]
    %v546 = vld [vmem:[%s6 + $0x30] sm:$0xff]
    %v547 = vld [vmem:[%s6 + $0x38] sm:$0xff]
    %549 = vset.pattern.permute.xlu0 0
    %550 = vperm.xlu0 %549, %v540
    %v551 = vpop.permute.xlu0 %550
    %554 = vset.pattern.permute.xlu0 0
    %555 = vperm.xlu0 %554, %v541
    %v556 = vpop.permute.xlu0 %555
    %559 = vset.pattern.permute.xlu0 0
    %560 = vperm.xlu0 %559, %v542
    %v561 = vpop.permute.xlu0 %560
    %564 = vset.pattern.permute.xlu0 0
    %565 = vperm.xlu0 %564, %v543
    %v566 = vpop.permute.xlu0 %565
    %569 = vset.pattern.permute.xlu0 0
    %570 = vperm.xlu0 %569, %v544
    %v571 = vpop.permute.xlu0 %570
    %574 = vset.pattern.permute.xlu0 0
    %575 = vperm.xlu0 %574, %v545
    %v576 = vpop.permute.xlu0 %575
    %579 = vset.pattern.permute.xlu0 0
    %580 = vperm.xlu0 %579, %v546
    %v581 = vpop.permute.xlu0 %580
    %584 = vset.pattern.permute.xlu0 0
    %585 = vperm.xlu0 %584, %v547
    %v586 = vpop.permute.xlu0 %585
    %v596 = vunpack.c.l.b16 %v532
    %v597 = vunpack.c.l.b16 %v533
    %v598 = vunpack.c.l.b16 %v534
    %v599 = vunpack.c.l.b16 %v535
    %v600 = vunpack.c.l.b16 %v536
    %v601 = vunpack.c.l.b16 %v537
    %v602 = vunpack.c.l.b16 %v538
    %v603 = vunpack.c.l.b16 %v539
    %v604 = vpack.c.b16 %v597, %v596
    %v605 = vpack.c.b16 %v599, %v598
    %v606 = vpack.c.b16 %v601, %v600
    %v607 = vpack.c.b16 %v603, %v602
    %612 = vmatprep.subr.bf16.mxu0 0
    %613 = vmatpush1.bf16.msra.mxu0 %v524
    %614 = vmatprep.subr.bf16.mxu0 0
    %615 = vmatpush1.bf16.msra.mxu0 %v525
    %616 = vmatprep.subr.bf16.mxu0 0
    %617 = vmatpush1.bf16.msra.mxu0 %v526
    %618 = vmatprep.subr.bf16.mxu0 0
    %619 = vmatpush1.bf16.msra.mxu0 %v527
    %620 = vmatprep.subr.bf16.mxu0 0
    %621 = vmatpush1.bf16.msra.mxu0 %v528
    %622 = vmatprep.subr.bf16.mxu0 0
    %623 = vmatpush1.bf16.msra.mxu0 %v529
    %624 = vmatprep.subr.bf16.mxu0 0
    %625 = vmatpush1.bf16.msra.mxu0 %v530
    %626 = vmatprep.subr.bf16.mxu0 0
    %627 = vmatpush1.bf16.msra.mxu0 %v531
    %628 = vmatprep.subr.bf16.mxu0 0
    %629 = vmatpush1.bf16.msra.mxu0 0
    %630 = vmatprep.subr.bf16.mxu0 0
    %631 = vmatpush1.bf16.msra.mxu0 0
    %632 = vmatprep.subr.bf16.mxu0 0
    %633 = vmatpush1.bf16.msra.mxu0 0
    %634 = vmatprep.subr.bf16.mxu0 0
    %635 = vmatpush1.bf16.msra.mxu0 0
    %636 = vmatprep.subr.bf16.mxu0 0
    %637 = vmatpush1.bf16.msra.mxu0 0
    %638 = vmatprep.subr.bf16.mxu0 0
    %639 = vmatpush1.bf16.msra.mxu0 0
    %640 = vmatprep.subr.bf16.mxu0 0
    %641 = vmatpush1.bf16.msra.mxu0 0
    %642 = vmatprep.subr.bf16.mxu0 0
    %643 = vmatpush1.bf16.msra.mxu0 0
    %644 = vmatprep.mubr.bf16.mxu0 0
    %645 = vmatmul.mubr.bf16.gmra.mrb[0].mxu0 %v604
    %v646 = vpop.f32.mrb[0].mxu0
    %v647 = vadd.f32 %v551, %v646
    %v648 = vpop.f32.mrb[0].mxu0
    %v649 = vpop.f32.mrb[0].mxu0
    %v650 = vadd.f32 %v556, %v649
    %v651 = vpop.f32.mrb[0].mxu0
    %652 = vmatprep.mubr.bf16.mxu0 0
    %653 = vmatmul.mubr.bf16.gmra.mrb[0].mxu0 %v605
    %v654 = vpop.f32.mrb[0].mxu0
    %v655 = vadd.f32 %v561, %v654
    %v656 = vpop.f32.mrb[0].mxu0
    %v657 = vpop.f32.mrb[0].mxu0
    %v658 = vadd.f32 %v566, %v657
    %v659 = vpop.f32.mrb[0].mxu0
    %660 = vmatprep.mubr.bf16.mxu0 0
    %661 = vmatmul.mubr.bf16.gmra.mrb[0].mxu0 %v606
    %v662 = vpop.f32.mrb[0].mxu0
    %v663 = vadd.f32 %v571, %v662
    %v664 = vpop.f32.mrb[0].mxu0
    %v665 = vpop.f32.mrb[0].mxu0
    %v666 = vadd.f32 %v576, %v665
    %v667 = vpop.f32.mrb[0].mxu0
    %668 = vmatprep.mubr.bf16.mxu0 0
    %669 = vmatmul.mubr.bf16.gmra.mrb[0].mxu0 %v607
    %v670 = vpop.f32.mrb[0].mxu0
    %v671 = vadd.f32 %v581, %v670
    %v672 = vpop.f32.mrb[0].mxu0
    %v673 = vpop.f32.mrb[0].mxu0
    %v674 = vadd.f32 %v586, %v673
    %v675 = vpop.f32.mrb[0].mxu0
    %676 = vdwg.mxu0
    %v677 = vmax.f32 %v647, 0.0
    %v678 = vmax.f32 %v650, 0.0
    %v679 = vmax.f32 %v655, 0.0
    %v680 = vmax.f32 %v658, 0.0
    %v681 = vmax.f32 %v663, 0.0
    %v682 = vmax.f32 %v666, 0.0
    %v683 = vmax.f32 %v671, 0.0
    %v684 = vmax.f32 %v674, 0.0
    %v685 = vpack.c.bf16 %v678, %v677
    %v686 = vpack.c.bf16 %v680, %v679
    %v687 = vpack.c.bf16 %v682, %v681
    %v688 = vpack.c.bf16 %v684, %v683
    %v689 = vld [vmem:[%s7] sm:$0x1]
    %v690 = vld [vmem:[#allocation2] sm:$0x1]
    %692 = vset.pattern.permute.xlu0 0
    %693 = vperm.xlu0 %692, %v690
    %v694 = vpop.permute.xlu0 %693
    %v696 = vlaneseq
    %v697 = vshrl.u32 %v696, 7
    %v698 = vsub.s32 0, %v697
    %v699 = vrot.slane %v694, %v698
    %v701 = vsel %vm370, %v689, 0
    %703 = vmatprep.subr.bf16.mxu0 0
    %704 = vmatpush1.bf16.msra.mxu0 %v685
    %705 = vmatprep.subr.bf16.mxu0 0
    %706 = vmatpush1.bf16.msra.mxu0 %v686
    %707 = vmatprep.subr.bf16.mxu0 0
    %708 = vmatpush1.bf16.msra.mxu0 %v687
    %709 = vmatprep.subr.bf16.mxu0 0
    %710 = vmatpush1.bf16.msra.mxu0 %v688
    %711 = vmatprep.subr.bf16.mxu0 0
    %712 = vmatpush1.bf16.msra.mxu0 0
    %713 = vmatprep.subr.bf16.mxu0 0
    %714 = vmatpush1.bf16.msra.mxu0 0
    %715 = vmatprep.subr.bf16.mxu0 0
    %716 = vmatpush1.bf16.msra.mxu0 0
    %717 = vmatprep.subr.bf16.mxu0 0
    %718 = vmatpush1.bf16.msra.mxu0 0
    %719 = vmatprep.subr.bf16.mxu0 0
    %720 = vmatpush1.bf16.msra.mxu0 0
    %721 = vmatprep.subr.bf16.mxu0 0
    %722 = vmatpush1.bf16.msra.mxu0 0
    %723 = vmatprep.subr.bf16.mxu0 0
    %724 = vmatpush1.bf16.msra.mxu0 0
    %725 = vmatprep.subr.bf16.mxu0 0
    %726 = vmatpush1.bf16.msra.mxu0 0
    %727 = vmatprep.subr.bf16.mxu0 0
    %728 = vmatpush1.bf16.msra.mxu0 0
    %729 = vmatprep.subr.bf16.mxu0 0
    %730 = vmatpush1.bf16.msra.mxu0 0
    %731 = vmatprep.subr.bf16.mxu0 0
    %732 = vmatpush1.bf16.msra.mxu0 0
    %733 = vmatprep.subr.bf16.mxu0 0
    %734 = vmatpush1.bf16.msra.mxu0 0
    %735 = vmatprep.mubr.bf16.mxu0 0
    %736 = vmatmul.mubr.bf16.gmra.mrb[0].mxu0 %v701
    %v737 = vpop.f32.mrb[0].mxu0
    %v738 = vadd.f32 %v699, %v737
    %v739 = vpop.f32.mrb[0].mxu0
    %v740 = vpop.f32.mrb[0].mxu0
    %v741 = vpop.f32.mrb[0].mxu0
    %742 = vdwg.mxu0
    %vm743 = vcmask 122880
    %744 = vst.msk [vmem:[#allocation3] sm:$0x1] %vm743, %v738
    // Predicated region
    $region38: #{tpu_custom_call.1} parent=1 // pred_check
      _
    $region39: #{tpu_custom_call.1} parent=1 // pred_check_branch
      %746 = sbr.rel (0) target = $region41
    $region40: #{tpu_custom_call.1} parent=1 // pred_region
      %s748 = ssub.s32 16, 16
      %749 = vsyncadd [#allocation4], %s748
      %s751 = sshll.u32 [#allocation3], 4
      %s752 = int_to_ptr.vmem [resolvable:$true] %s751
      %754 = dma.vmem_to_hbm [thread:$0]  %s752, 16, %s9, [#allocation4]
    $region41: #{tpu_custom_call.1} parent=1 // pred_fallthru
      _
    // Predicated region
    $region42: #{tpu_custom_call.1} parent=1 // pred_check
      _
    $region43: #{tpu_custom_call.1} parent=1 // pred_check_branch
      %756 = sbr.rel (0) target = $region45
    $region44: #{tpu_custom_call.1} parent=1 // pred_region
      %757 = dma.done [#allocation4], 16
    $region45: #{tpu_custom_call.1} parent=1 // pred_fallthru
      _
    %758 = vsyncpa [#allocation4], 1

</llo_original>
